<compile_context>
chip_gen: v7x
topology: tpu7x:2x2x1
jax: 0.10.0
libtpu: 0.0.40
codegen_flags: <defaults>
</compile_context>

<pallas_src>
import functools

import jax
import jax.numpy as jnp
from jax.experimental import pallas as pl
from jax.experimental.pallas import tpu as pltpu

SIZE = 32       # stand-in for len(train.loc[0]) (mushroom.csv feature count)
F_PAD = 128     # feature dim padded to a full 128-lane vreg (lane-dense)
ROW_PAD = 8     # rows padded to a full sublane tile


# ------------------------------- fused kernels -------------------------------
def _baseline_fused_kernel(x_ref, w1_ref, b1_ref, w2_ref, b2_ref, o_ref):
    # y = ReLU(ReLU(x @ W1 + b1) @ W2 + b2), everything VMEM-resident.
    h = jnp.dot(x_ref[...], w1_ref[...], preferred_element_type=jnp.float32)
    h = jnp.maximum(h + b1_ref[...], 0.0)
    y = jnp.dot(h, w2_ref[...], preferred_element_type=jnp.float32)
    o_ref[...] = jnp.maximum(y + b2_ref[...], 0.0)


def _lstm_fused_kernel(x_ref, wih1_ref, bg1_ref, wl1_ref, bl1_ref,
                       wih2_ref, bg2_ref, wl2_ref, bl2_ref, o_ref):
    # Single-step LSTM (zero h0/c0) -> Linear -> LSTM -> Linear, fully fused.
    # Gates are laid out one per 128-lane block, so each slice is exactly one
    # vreg-aligned lane block (pure VPU/EUP work, no masked stores / XLU).
    F = F_PAD

    def cell(a, wih, bg):
        g = jnp.dot(a, wih, preferred_element_type=jnp.float32) + bg
        i = jax.nn.sigmoid(g[:, 0 * F:1 * F])
        gg = jnp.tanh(g[:, 2 * F:3 * F])
        o = jax.nn.sigmoid(g[:, 3 * F:4 * F])
        return o * jnp.tanh(i * gg)      # c = i * g  (forget gate dead, c0 == 0)

    h = cell(x_ref[...], wih1_ref[...], bg1_ref[...])
    h = jnp.dot(h, wl1_ref[...], preferred_element_type=jnp.float32) + bl1_ref[...]
    h = cell(h, wih2_ref[...], bg2_ref[...])
    o_ref[...] = (jnp.dot(h, wl2_ref[...], preferred_element_type=jnp.float32)
                  + bl2_ref[...])


# ------------------------------- pallas wrapper -------------------------------
def _vmem_spec():
    return pl.BlockSpec(memory_space=pltpu.MemorySpace.VMEM)


def _fused_call(kernel, xp, *ops):
    Mp, F = xp.shape
    return pl.pallas_call(
        kernel,
        out_shape=jax.ShapeDtypeStruct((Mp, F), jnp.float32),
        in_specs=[_vmem_spec() for _ in range(1 + len(ops))],
        out_specs=_vmem_spec(),
    )(xp, *ops)


# --------------------------- parameter preparation ----------------------------
def init_params(key, size=SIZE):
    ks = jax.random.split(key, 14)
    s = 1.0 / jnp.sqrt(jnp.float32(size))
    u = lambda k, shape: jax.random.uniform(k, shape, jnp.float32, -s, s)
    return dict(
        # baseline Linear layers (weights stored transposed: (in, out))
        base_enc_w=u(ks[0], (size, size)), base_enc_b=u(ks[1], (size,)),
        base_dec_w=u(ks[2], (size, size)), base_dec_b=u(ks[3], (size,)),
        # lstm encoder: W_ih^T (in, 4H) with gates [i,f,g,o]; bias = b_ih + b_hh
        enc_lstm_wih=u(ks[4], (size, 4 * size)),
        enc_lstm_b=u(ks[5], (4 * size,)) + u(ks[6], (4 * size,)),
        enc_lin_w=u(ks[7], (size, size)), enc_lin_b=u(ks[8], (size,)),
        # lstm decoder
        dec_lstm_wih=u(ks[9], (size, 4 * size)),
        dec_lstm_b=u(ks[10], (4 * size,)) + u(ks[11], (4 * size,)),
        dec_lin_w=u(ks[12], (size, size)), dec_lin_b=u(ks[13], (size,)),
    )


def _pad_linear(w, b):
    wp = jnp.zeros((F_PAD, F_PAD), jnp.float32).at[:SIZE, :SIZE].set(w)
    bp = jnp.zeros((1, F_PAD), jnp.float32).at[0, :SIZE].set(b)
    return wp, bp


def _pad_lstm(wih, bias):
    # Re-layout so gate k occupies its own 128-lane block [k*F_PAD, k*F_PAD+SIZE).
    wp = jnp.zeros((F_PAD, 4 * F_PAD), jnp.float32)
    bp = jnp.zeros((1, 4 * F_PAD), jnp.float32)
    for k in range(4):
        wp = wp.at[:SIZE, k * F_PAD:k * F_PAD + SIZE].set(
            wih[:, k * SIZE:(k + 1) * SIZE])
        bp = bp.at[0, k * F_PAD:k * F_PAD + SIZE].set(
            bias[k * SIZE:(k + 1) * SIZE])
    return wp, bp


def pad_params(p):
    padded = {}
    padded['base_enc_w'], padded['base_enc_b'] = _pad_linear(p['base_enc_w'], p['base_enc_b'])
    padded['base_dec_w'], padded['base_dec_b'] = _pad_linear(p['base_dec_w'], p['base_dec_b'])
    padded['enc_lstm_w'], padded['enc_lstm_b'] = _pad_lstm(p['enc_lstm_wih'], p['enc_lstm_b'])
    padded['enc_lin_w'], padded['enc_lin_b'] = _pad_linear(p['enc_lin_w'], p['enc_lin_b'])
    padded['dec_lstm_w'], padded['dec_lstm_b'] = _pad_lstm(p['dec_lstm_wih'], p['dec_lstm_b'])
    padded['dec_lin_w'], padded['dec_lin_b'] = _pad_linear(p['dec_lin_w'], p['dec_lin_b'])
    return padded


# ---------------------------------- forward -----------------------------------
@functools.partial(jax.jit, static_argnames=("baseline", "lstm"))
def autoencoder_forward(x, padded, *, baseline, lstm):
    # torch forward does x[None, :]; an already-batched (M, size) input is also
    # accepted so repeated per-sample evaluation can be amortized in one kernel.
    x2d = jnp.atleast_2d(x).astype(jnp.float32)
    M = x2d.shape[0]
    Mp = max(ROW_PAD, -(-M // ROW_PAD) * ROW_PAD)
    xp = jnp.zeros((Mp, F_PAD), jnp.float32).at[:M, :SIZE].set(x2d)
    if baseline:
        y = _fused_call(_baseline_fused_kernel, xp,
                        padded['base_enc_w'], padded['base_enc_b'],
                        padded['base_dec_w'], padded['base_dec_b'])
    elif lstm:
        y = _fused_call(_lstm_fused_kernel, xp,
                        padded['enc_lstm_w'], padded['enc_lstm_b'],
                        padded['enc_lin_w'], padded['enc_lin_b'],
                        padded['dec_lstm_w'], padded['dec_lstm_b'],
                        padded['dec_lin_w'], padded['dec_lin_b'])
    else:
        raise ValueError("one of baseline / lstm must be True")
    return y[:M, :SIZE]


# ----------------------------- pure-JAX reference -----------------------------
def _ref_forward(x2d, p, *, baseline, lstm):
    v = x2d.astype(jnp.float32)
    lin = lambda a, w, b: a @ w + b

    def cell(a, wih, b):
        g = a @ wih + b
        H = g.shape[-1] // 4
        i = jax.nn.sigmoid(g[:, :H])
        gg = jnp.tanh(g[:, 2 * H:3 * H])
        o = jax.nn.sigmoid(g[:, 3 * H:])
        return o * jnp.tanh(i * gg)

    if baseline:
        v = jnp.maximum(lin(v, p['base_enc_w'], p['base_enc_b']), 0.0)
        return jnp.maximum(lin(v, p['base_dec_w'], p['base_dec_b']), 0.0)
    v = cell(v, p['enc_lstm_wih'], p['enc_lstm_b'])
    v = lin(v, p['enc_lin_w'], p['enc_lin_b'])
    v = cell(v, p['dec_lstm_wih'], p['dec_lstm_b'])
    return lin(v, p['dec_lin_w'], p['dec_lin_b'])


# TODO(synk): pandas CSV read and the module-scope nan/inf torch.tensor probe
# are data-loading glue, not part of the forward pass; not reproduced here.

if __name__ == "__main__":
    key = jax.random.PRNGKey(0)
    k_x, k_b, k_p = jax.random.split(key, 3)
    x = jax.random.normal(k_x, (SIZE,), jnp.float32)        # single sample, as in the module
    xb = jax.random.normal(k_b, (16, SIZE), jnp.float32)    # batched path (amortized launch)
    params = init_params(k_p, SIZE)
    padded = pad_params(params)

    y_lstm = jax.block_until_ready(
        autoencoder_forward(x, padded, baseline=False, lstm=True))
    y_base = jax.block_until_ready(
        autoencoder_forward(x, padded, baseline=True, lstm=False))
    y_lstm_b = jax.block_until_ready(
        autoencoder_forward(xb, padded, baseline=False, lstm=True))

    r_lstm = _ref_forward(x[None, :], params, baseline=False, lstm=True)
    r_base = _ref_forward(x[None, :], params, baseline=True, lstm=False)
    r_lstm_b = _ref_forward(xb, params, baseline=False, lstm=True)

    assert y_lstm.shape == (1, SIZE) and y_base.shape == (1, SIZE)
    assert y_lstm_b.shape == (16, SIZE)
    assert float(jnp.max(jnp.abs(y_lstm - r_lstm))) < 1e-4
    assert float(jnp.max(jnp.abs(y_base - r_base))) < 1e-4
    assert float(jnp.max(jnp.abs(y_lstm_b - r_lstm_b))) < 1e-4
    print("KERNEL_OK")
</pallas_src>

<mosaic_0001>
module attributes {stable_mosaic.version = 11 : i64} {
  func.func @_lstm_fused_kernel(%arg0: memref<8x128xf32, #tpu.memory_space<vmem>>, %arg1: memref<128x512xf32, #tpu.memory_space<vmem>>, %arg2: memref<1x512xf32, #tpu.memory_space<vmem>>, %arg3: memref<128x128xf32, #tpu.memory_space<vmem>>, %arg4: memref<1x128xf32, #tpu.memory_space<vmem>>, %arg5: memref<128x512xf32, #tpu.memory_space<vmem>>, %arg6: memref<1x512xf32, #tpu.memory_space<vmem>>, %arg7: memref<128x128xf32, #tpu.memory_space<vmem>>, %arg8: memref<1x128xf32, #tpu.memory_space<vmem>>, %arg9: memref<8x128xf32, #tpu.memory_space<vmem>>) attributes {dimension_semantics = [], scalar_prefetch = 0 : i64, scratch_operands = 0 : i64, tpu.core_type = #tpu.core_type<tc>} {
    %c0 = arith.constant 0 : index
    %c0_0 = arith.constant 0 : index
    %0 = vector.load %arg0[%c0, %c0_0] : memref<8x128xf32, #tpu.memory_space<vmem>>, vector<8x128xf32>
    %c0_1 = arith.constant 0 : index
    %c0_2 = arith.constant 0 : index
    %1 = vector.load %arg1[%c0_1, %c0_2] : memref<128x512xf32, #tpu.memory_space<vmem>>, vector<128x512xf32>
    %c0_3 = arith.constant 0 : index
    %c0_4 = arith.constant 0 : index
    %2 = vector.load %arg2[%c0_3, %c0_4] : memref<1x512xf32, #tpu.memory_space<vmem>>, vector<1x512xf32>
    %cst = arith.constant dense<0.000000e+00> : vector<8x512xf32>
    %3 = tpu.matmul %0, %1, %cst {dimension_numbers = #tpu.dot_dimension_numbers<[1], [0], [0], [1], [0, 0, 1, 1], [], []>} : vector<8x128xf32>, vector<128x512xf32>, vector<8x512xf32> -> vector<8x512xf32>
    %4 = vector.broadcast %2 : vector<1x512xf32> to vector<8x512xf32>
    %5 = arith.addf %3, %4 : vector<8x512xf32>
    %6 = vector.extract_strided_slice %5 {offsets = [0, 0], sizes = [8, 128], strides = [1, 1]} : vector<8x512xf32> to vector<8x128xf32>
    %7 = arith.negf %6 : vector<8x128xf32>
    %8 = math.exp %7 : vector<8x128xf32>
    %cst_5 = arith.constant 1.000000e+00 : f32
    %9 = vector.broadcast %cst_5 : f32 to vector<8x128xf32>
    %10 = arith.addf %9, %8 : vector<8x128xf32>
    %11 = arith.divf %9, %10 : vector<8x128xf32>
    %12 = vector.extract_strided_slice %5 {offsets = [0, 256], sizes = [8, 128], strides = [1, 1]} : vector<8x512xf32> to vector<8x128xf32>
    %13 = math.tanh %12 : vector<8x128xf32>
    %14 = vector.extract_strided_slice %5 {offsets = [0, 384], sizes = [8, 128], strides = [1, 1]} : vector<8x512xf32> to vector<8x128xf32>
    %15 = arith.negf %14 : vector<8x128xf32>
    %16 = math.exp %15 : vector<8x128xf32>
    %cst_6 = arith.constant 1.000000e+00 : f32
    %17 = vector.broadcast %cst_6 : f32 to vector<8x128xf32>
    %18 = arith.addf %17, %16 : vector<8x128xf32>
    %19 = arith.divf %17, %18 : vector<8x128xf32>
    %20 = arith.mulf %11, %13 : vector<8x128xf32>
    %21 = math.tanh %20 : vector<8x128xf32>
    %22 = arith.mulf %19, %21 : vector<8x128xf32>
    %c0_7 = arith.constant 0 : index
    %c0_8 = arith.constant 0 : index
    %23 = vector.load %arg3[%c0_7, %c0_8] : memref<128x128xf32, #tpu.memory_space<vmem>>, vector<128x128xf32>
    %cst_9 = arith.constant dense<0.000000e+00> : vector<8x128xf32>
    %24 = tpu.matmul %22, %23, %cst_9 {dimension_numbers = #tpu.dot_dimension_numbers<[1], [0], [0], [1], [0, 0, 1, 1], [], []>} : vector<8x128xf32>, vector<128x128xf32>, vector<8x128xf32> -> vector<8x128xf32>
    %c0_10 = arith.constant 0 : index
    %c0_11 = arith.constant 0 : index
    %25 = vector.load %arg4[%c0_10, %c0_11] : memref<1x128xf32, #tpu.memory_space<vmem>>, vector<1x128xf32>
    %26 = vector.broadcast %25 : vector<1x128xf32> to vector<8x128xf32>
    %27 = arith.addf %24, %26 : vector<8x128xf32>
    %c0_12 = arith.constant 0 : index
    %c0_13 = arith.constant 0 : index
    %28 = vector.load %arg5[%c0_12, %c0_13] : memref<128x512xf32, #tpu.memory_space<vmem>>, vector<128x512xf32>
    %c0_14 = arith.constant 0 : index
    %c0_15 = arith.constant 0 : index
    %29 = vector.load %arg6[%c0_14, %c0_15] : memref<1x512xf32, #tpu.memory_space<vmem>>, vector<1x512xf32>
    %cst_16 = arith.constant dense<0.000000e+00> : vector<8x512xf32>
    %30 = tpu.matmul %27, %28, %cst_16 {dimension_numbers = #tpu.dot_dimension_numbers<[1], [0], [0], [1], [0, 0, 1, 1], [], []>} : vector<8x128xf32>, vector<128x512xf32>, vector<8x512xf32> -> vector<8x512xf32>
    %31 = vector.broadcast %29 : vector<1x512xf32> to vector<8x512xf32>
    %32 = arith.addf %30, %31 : vector<8x512xf32>
    %33 = vector.extract_strided_slice %32 {offsets = [0, 0], sizes = [8, 128], strides = [1, 1]} : vector<8x512xf32> to vector<8x128xf32>
    %34 = arith.negf %33 : vector<8x128xf32>
    %35 = math.exp %34 : vector<8x128xf32>
    %cst_17 = arith.constant 1.000000e+00 : f32
    %36 = vector.broadcast %cst_17 : f32 to vector<8x128xf32>
    %37 = arith.addf %36, %35 : vector<8x128xf32>
    %38 = arith.divf %36, %37 : vector<8x128xf32>
    %39 = vector.extract_strided_slice %32 {offsets = [0, 256], sizes = [8, 128], strides = [1, 1]} : vector<8x512xf32> to vector<8x128xf32>
    %40 = math.tanh %39 : vector<8x128xf32>
    %41 = vector.extract_strided_slice %32 {offsets = [0, 384], sizes = [8, 128], strides = [1, 1]} : vector<8x512xf32> to vector<8x128xf32>
    %42 = arith.negf %41 : vector<8x128xf32>
    %43 = math.exp %42 : vector<8x128xf32>
    %cst_18 = arith.constant 1.000000e+00 : f32
    %44 = vector.broadcast %cst_18 : f32 to vector<8x128xf32>
    %45 = arith.addf %44, %43 : vector<8x128xf32>
    %46 = arith.divf %44, %45 : vector<8x128xf32>
    %47 = arith.mulf %38, %40 : vector<8x128xf32>
    %48 = math.tanh %47 : vector<8x128xf32>
    %49 = arith.mulf %46, %48 : vector<8x128xf32>
    %c0_19 = arith.constant 0 : index
    %c0_20 = arith.constant 0 : index
    %50 = vector.load %arg7[%c0_19, %c0_20] : memref<128x128xf32, #tpu.memory_space<vmem>>, vector<128x128xf32>
    %cst_21 = arith.constant dense<0.000000e+00> : vector<8x128xf32>
    %51 = tpu.matmul %49, %50, %cst_21 {dimension_numbers = #tpu.dot_dimension_numbers<[1], [0], [0], [1], [0, 0, 1, 1], [], []>} : vector<8x128xf32>, vector<128x128xf32>, vector<8x128xf32> -> vector<8x128xf32>
    %c0_22 = arith.constant 0 : index
    %c0_23 = arith.constant 0 : index
    %52 = vector.load %arg8[%c0_22, %c0_23] : memref<1x128xf32, #tpu.memory_space<vmem>>, vector<1x128xf32>
    %53 = vector.broadcast %52 : vector<1x128xf32> to vector<8x128xf32>
    %54 = arith.addf %51, %53 : vector<8x128xf32>
    %c0_24 = arith.constant 0 : index
    %c0_25 = arith.constant 0 : index
    %55 = vector.load %arg9[%c0_24, %c0_25] : memref<8x128xf32, #tpu.memory_space<vmem>>, vector<8x128xf32>
    tpu.vector_store %arg9[%c0_24, %c0_25], %54 {strides = array<i32>} : memref<8x128xf32, #tpu.memory_space<vmem>>, vector<8x128xf32>,
    return
  }
}

</mosaic_0001>

<llo_original>
// kernel: autoencoder_forward.1
$region0: #{autoencoder_forward.1}
  #allocation0 [shape = 'u32[]', space=smem, size = 0x4, offset = 0x4, fixed_abs, tag = 'smem constant byte address 0x4 - core index']
  #allocation1 [shape = 'u32[144,128]{1,0:T(1,128)}', space=vmem, size = 0x12000, scoped, tag = 'internal scratch']
  %s0 = inlined_call_operand.vmem [shape: f32[8,128], index: 0, kind: input, shape index: {}]
  %s1 = inlined_call_operand.hbm [shape: f32[128,512], index: 1, kind: input, shape index: {}]
  %s2 = inlined_call_operand.vmem [shape: f32[1,512], index: 2, kind: input, shape index: {}]
  %s3 = inlined_call_operand.hbm [shape: f32[128,128], index: 3, kind: input, shape index: {}]
  %s4 = inlined_call_operand.vmem [shape: f32[1,128], index: 4, kind: input, shape index: {}]
  %s5 = inlined_call_operand.hbm [shape: f32[128,512], index: 5, kind: input, shape index: {}]
  %s6 = inlined_call_operand.vmem [shape: f32[1,512], index: 6, kind: input, shape index: {}]
  %s7 = inlined_call_operand.hbm [shape: f32[128,128], index: 7, kind: input, shape index: {}]
  %s8 = inlined_call_operand.vmem [shape: f32[1,128], index: 8, kind: input, shape index: {}]
  %s9 = inlined_call_operand.vmem [shape: f32[8,128], index: 9, kind: output, shape index: {}]
  %s10 = sld [smem:[#allocation0]]
  $region62: #{autoencoder_forward.1} parent=0
    _
  %s12 = ssub.s32 1, %s10
  %s13 = scalar_select 0, %s12, %s10
  $region1: #{autoencoder_forward.1} parent=0
    #allocation2 [shape = 'u8[262144]{0}', space=vmem, size = 0x40000, scoped, tag = 'input window, operand 1, single buffered']
    #allocation3 [shape = 's32[1]{0}', space=sflag, size = 0x4, scoped, tag = 'scoped memory for autoencoder_forward.1']
    #allocation4 [shape = 'u8[65536]{0}', space=vmem, size = 0x10000, scoped, tag = 'input window, operand 3, single buffered']
    #allocation5 [shape = 's32[1]{0}', space=sflag, size = 0x4, scoped, tag = 'scoped memory for autoencoder_forward.1']
    #allocation6 [shape = 'u8[262144]{0}', space=vmem, size = 0x40000, scoped, tag = 'input window, operand 5, single buffered']
    #allocation7 [shape = 'u8[65536]{0}', space=vmem, size = 0x10000, scoped, tag = 'input window, operand 7, single buffered']
    #allocation8 [shape = 's32[1]{0}', space=sflag, size = 0x4, scoped, tag = 'scoped memory for autoencoder_forward.1']
    %14 = vsyncpa [#allocation3], 0
    %15 = vsyncpa [#allocation5], 0
    %16 = vsyncpa [#allocation8], 0
    // Predicated region
    $region2: #{autoencoder_forward.1} parent=1 // pred_check
      _
    $region3: #{autoencoder_forward.1} parent=1 // pred_check_branch
      %18 = sbr.rel (0) target = $region5
    $region4: #{autoencoder_forward.1} parent=1 // pred_region
      _
    $region5: #{autoencoder_forward.1} parent=1 // pred_fallthru
      _
    // Predicated region
    $region6: #{autoencoder_forward.1} parent=1 // pred_check
      _
    $region7: #{autoencoder_forward.1} parent=1 // pred_check_branch
      %20 = sbr.rel (0) target = $region9
    $region8: #{autoencoder_forward.1} parent=1 // pred_region
      %s22 = ssub.s32 8192, 8192
      %23 = vsyncadd [#allocation3], %s22
      %s24 = sshll.u32 [#allocation2], 4
      %s25 = int_to_ptr.vmem [resolvable:$true] %s24
      %30 = dma.hbm_to_vmem [thread:$0]  %s1, 8192, %s25, [#allocation3], 512, 512, 32
    $region9: #{autoencoder_forward.1} parent=1 // pred_fallthru
      _
    // Predicated region
    $region10: #{autoencoder_forward.1} parent=1 // pred_check
      _
    $region11: #{autoencoder_forward.1} parent=1 // pred_check_branch
      %32 = sbr.rel (0) target = $region13
    $region12: #{autoencoder_forward.1} parent=1 // pred_region
      _
    $region13: #{autoencoder_forward.1} parent=1 // pred_fallthru
      _
    // Predicated region
    $region14: #{autoencoder_forward.1} parent=1 // pred_check
      _
    $region15: #{autoencoder_forward.1} parent=1 // pred_check_branch
      %34 = sbr.rel (0) target = $region17
    $region16: #{autoencoder_forward.1} parent=1 // pred_region
      %s36 = ssub.s32 2048, 2048
      %37 = vsyncadd [#allocation5], %s36
      %s38 = sshll.u32 [#allocation4], 4
      %s39 = int_to_ptr.vmem [resolvable:$true] %s38
      %44 = dma.hbm_to_vmem [thread:$0]  %s3, 2048, %s39, [#allocation5], 128, 128, 8
    $region17: #{autoencoder_forward.1} parent=1 // pred_fallthru
      _
    // Predicated region
    $region18: #{autoencoder_forward.1} parent=1 // pred_check
      _
    $region19: #{autoencoder_forward.1} parent=1 // pred_check_branch
      %46 = sbr.rel (0) target = $region21
    $region20: #{autoencoder_forward.1} parent=1 // pred_region
      _
    $region21: #{autoencoder_forward.1} parent=1 // pred_fallthru
      _
    // Predicated region
    $region22: #{autoencoder_forward.1} parent=1 // pred_check
      _
    $region23: #{autoencoder_forward.1} parent=1 // pred_check_branch
      %48 = sbr.rel (0) target = $region25
    $region24: #{autoencoder_forward.1} parent=1 // pred_region
      %s50 = ssub.s32 8192, 8192
      %51 = vsyncadd [#allocation5], %s50
      %s52 = sshll.u32 [#allocation6], 4
      %s53 = int_to_ptr.vmem [resolvable:$true] %s52
      %58 = dma.hbm_to_vmem [thread:$0]  %s5, 8192, %s53, [#allocation5], 512, 512, 32
    $region25: #{autoencoder_forward.1} parent=1 // pred_fallthru
      _
    // Predicated region
    $region26: #{autoencoder_forward.1} parent=1 // pred_check
      _
    $region27: #{autoencoder_forward.1} parent=1 // pred_check_branch
      %60 = sbr.rel (0) target = $region29
    $region28: #{autoencoder_forward.1} parent=1 // pred_region
      _
    $region29: #{autoencoder_forward.1} parent=1 // pred_fallthru
      _
    // Predicated region
    $region30: #{autoencoder_forward.1} parent=1 // pred_check
      _
    $region31: #{autoencoder_forward.1} parent=1 // pred_check_branch
      %62 = sbr.rel (0) target = $region33
    $region32: #{autoencoder_forward.1} parent=1 // pred_region
      %s64 = ssub.s32 2048, 2048
      %65 = vsyncadd [#allocation8], %s64
      %s66 = sshll.u32 [#allocation7], 4
      %s67 = int_to_ptr.vmem [resolvable:$true] %s66
      %72 = dma.hbm_to_vmem [thread:$0]  %s7, 2048, %s67, [#allocation8], 128, 128, 8
    $region33: #{autoencoder_forward.1} parent=1 // pred_fallthru
      _
    // Predicated region
    $region34: #{autoencoder_forward.1} parent=1 // pred_check
      _
    $region35: #{autoencoder_forward.1} parent=1 // pred_check_branch
      %74 = sbr.rel (0) target = $region37
    $region36: #{autoencoder_forward.1} parent=1 // pred_region
      _
    $region37: #{autoencoder_forward.1} parent=1 // pred_fallthru
      _
    // Predicated region
    $region38: #{autoencoder_forward.1} parent=1 // pred_check
      _
    $region39: #{autoencoder_forward.1} parent=1 // pred_check_branch
      %76 = sbr.rel (0) target = $region41
    $region40: #{autoencoder_forward.1} parent=1 // pred_region
      %77 = dma.done [#allocation3], 8192
    $region41: #{autoencoder_forward.1} parent=1 // pred_fallthru
      _
    // Predicated region
    $region42: #{autoencoder_forward.1} parent=1 // pred_check
      _
    $region43: #{autoencoder_forward.1} parent=1 // pred_check_branch
      %79 = sbr.rel (0) target = $region45
    $region44: #{autoencoder_forward.1} parent=1 // pred_region
      %80 = dma.done [#allocation5], 2048
    $region45: #{autoencoder_forward.1} parent=1 // pred_fallthru
      _
    // Predicated region
    $region46: #{autoencoder_forward.1} parent=1 // pred_check
      _
    $region47: #{autoencoder_forward.1} parent=1 // pred_check_branch
      %82 = sbr.rel (0) target = $region49
    $region48: #{autoencoder_forward.1} parent=1 // pred_region
      %83 = dma.done [#allocation5], 8192
    $region49: #{autoencoder_forward.1} parent=1 // pred_fallthru
      _
    // Predicated region
    $region50: #{autoencoder_forward.1} parent=1 // pred_check
      _
    $region51: #{autoencoder_forward.1} parent=1 // pred_check_branch
      %85 = sbr.rel (0) target = $region53
    $region52: #{autoencoder_forward.1} parent=1 // pred_region
      %86 = dma.done [#allocation8], 2048
    $region53: #{autoencoder_forward.1} parent=1 // pred_fallthru
      _
    %v87 = vld [vmem:[%s0] sm:$0xff]
    %v88 = vld [vmem:[#allocation2] sm:$0xff]
    %v89 = vld [vmem:[#allocation2 + $0x8] sm:$0xff]
    %v90 = vld [vmem:[#allocation2 + $0x10] sm:$0xff]
    %v91 = vld [vmem:[#allocation2 + $0x18] sm:$0xff]
    %v92 = vld [vmem:[#allocation2 + $0x20] sm:$0xff]
    %v93 = vld [vmem:[#allocation2 + $0x28] sm:$0xff]
    %v94 = vld [vmem:[#allocation2 + $0x30] sm:$0xff]
    %v95 = vld [vmem:[#allocation2 + $0x38] sm:$0xff]
    %v96 = vld [vmem:[#allocation2 + $0x40] sm:$0xff]
    %v97 = vld [vmem:[#allocation2 + $0x48] sm:$0xff]
    %v98 = vld [vmem:[#allocation2 + $0x50] sm:$0xff]
    %v99 = vld [vmem:[#allocation2 + $0x58] sm:$0xff]
    %v100 = vld [vmem:[#allocation2 + $0x60] sm:$0xff]
    %v101 = vld [vmem:[#allocation2 + $0x68] sm:$0xff]
    %v102 = vld [vmem:[#allocation2 + $0x70] sm:$0xff]
    %v103 = vld [vmem:[#allocation2 + $0x78] sm:$0xff]
    %v104 = vld [vmem:[#allocation2 + $0x80] sm:$0xff]
    %v105 = vld [vmem:[#allocation2 + $0x88] sm:$0xff]
    %v106 = vld [vmem:[#allocation2 + $0x90] sm:$0xff]
    %v107 = vld [vmem:[#allocation2 + $0x98] sm:$0xff]
    %v108 = vld [vmem:[#allocation2 + $0xa0] sm:$0xff]
    %v109 = vld [vmem:[#allocation2 + $0xa8] sm:$0xff]
    %v110 = vld [vmem:[#allocation2 + $0xb0] sm:$0xff]
    %v111 = vld [vmem:[#allocation2 + $0xb8] sm:$0xff]
    %v112 = vld [vmem:[#allocation2 + $0xc0] sm:$0xff]
    %v113 = vld [vmem:[#allocation2 + $0xc8] sm:$0xff]
    %v114 = vld [vmem:[#allocation2 + $0xd0] sm:$0xff]
    %v115 = vld [vmem:[#allocation2 + $0xd8] sm:$0xff]
    %v116 = vld [vmem:[#allocation2 + $0xe0] sm:$0xff]
    %v117 = vld [vmem:[#allocation2 + $0xe8] sm:$0xff]
    %v118 = vld [vmem:[#allocation2 + $0xf0] sm:$0xff]
    %v119 = vld [vmem:[#allocation2 + $0xf8] sm:$0xff]
    %v120 = vld [vmem:[#allocation2 + $0x100] sm:$0xff]
    %v121 = vld [vmem:[#allocation2 + $0x108] sm:$0xff]
    %v122 = vld [vmem:[#allocation2 + $0x110] sm:$0xff]
    %v123 = vld [vmem:[#allocation2 + $0x118] sm:$0xff]
    %v124 = vld [vmem:[#allocation2 + $0x120] sm:$0xff]
    %v125 = vld [vmem:[#allocation2 + $0x128] sm:$0xff]
    %v126 = vld [vmem:[#allocation2 + $0x130] sm:$0xff]
    %v127 = vld [vmem:[#allocation2 + $0x138] sm:$0xff]
    %v128 = vld [vmem:[#allocation2 + $0x140] sm:$0xff]
    %v129 = vld [vmem:[#allocation2 + $0x148] sm:$0xff]
    %v130 = vld [vmem:[#allocation2 + $0x150] sm:$0xff]
    %v131 = vld [vmem:[#allocation2 + $0x158] sm:$0xff]
    %v132 = vld [vmem:[#allocation2 + $0x160] sm:$0xff]
    %v133 = vld [vmem:[#allocation2 + $0x168] sm:$0xff]
    %v134 = vld [vmem:[#allocation2 + $0x170] sm:$0xff]
    %v135 = vld [vmem:[#allocation2 + $0x178] sm:$0xff]
    %v136 = vld [vmem:[#allocation2 + $0x180] sm:$0xff]
    %v137 = vld [vmem:[#allocation2 + $0x188] sm:$0xff]
    %v138 = vld [vmem:[#allocation2 + $0x190] sm:$0xff]
    %v139 = vld [vmem:[#allocation2 + $0x198] sm:$0xff]
    %v140 = vld [vmem:[#allocation2 + $0x1a0] sm:$0xff]
    %v141 = vld [vmem:[#allocation2 + $0x1a8] sm:$0xff]
    %v142 = vld [vmem:[#allocation2 + $0x1b0] sm:$0xff]
    %v143 = vld [vmem:[#allocation2 + $0x1b8] sm:$0xff]
    %v144 = vld [vmem:[#allocation2 + $0x1c0] sm:$0xff]
    %v145 = vld [vmem:[#allocation2 + $0x1c8] sm:$0xff]
    %v146 = vld [vmem:[#allocation2 + $0x1d0] sm:$0xff]
    %v147 = vld [vmem:[#allocation2 + $0x1d8] sm:$0xff]
    %v148 = vld [vmem:[#allocation2 + $0x1e0] sm:$0xff]
    %v149 = vld [vmem:[#allocation2 + $0x1e8] sm:$0xff]
    %v150 = vld [vmem:[#allocation2 + $0x1f0] sm:$0xff]
    %v151 = vld [vmem:[#allocation2 + $0x1f8] sm:$0xff]
    %v152 = vld [vmem:[%s2] sm:$0xf]
    %v154 = vlaneseq
    %v155 = vshrl.u32 %v154, 7
    %v156 = vsub.s32 0, %v155
    %v157 = vrot.slane %v152, %v156
    %v158 = vlaneseq
    %v159 = vshrl.u32 %v158, 7
    %v160 = vsub.s32 2, %v159
    %v161 = vrot.slane %v152, %v160
    %v162 = vlaneseq
    %v163 = vshrl.u32 %v162, 7
    %v164 = vsub.s32 3, %v163
    %v165 = vrot.slane %v152, %v164
    %169 = vmatprep.subr.mxu0 %v89
    %170 = vmatpush1.msra.mxu0 %v88
    %171 = vmatprep.subr.mxu0 %v93
    %172 = vmatpush1.msra.mxu0 %v92
    %173 = vmatprep.subr.mxu0 %v97
    %174 = vmatpush1.msra.mxu0 %v96
    %175 = vmatprep.subr.mxu0 %v101
    %176 = vmatpush1.msra.mxu0 %v100
    %177 = vmatprep.subr.mxu0 %v105
    %178 = vmatpush1.msra.mxu0 %v104
    %179 = vmatprep.subr.mxu0 %v109
    %180 = vmatpush1.msra.mxu0 %v108
    %181 = vmatprep.subr.mxu0 %v113
    %182 = vmatpush1.msra.mxu0 %v112
    %183 = vmatprep.subr.mxu0 %v117
    %184 = vmatpush1.msra.mxu0 %v116
    %185 = vmatprep.subr.mxu0 %v121
    %186 = vmatpush1.msra.mxu0 %v120
    %187 = vmatprep.subr.mxu0 %v125
    %188 = vmatpush1.msra.mxu0 %v124
    %189 = vmatprep.subr.mxu0 %v129
    %190 = vmatpush1.msra.mxu0 %v128
    %191 = vmatprep.subr.mxu0 %v133
    %192 = vmatpush1.msra.mxu0 %v132
    %193 = vmatprep.subr.mxu0 %v137
    %194 = vmatpush1.msra.mxu0 %v136
    %195 = vmatprep.subr.mxu0 %v141
    %196 = vmatpush1.msra.mxu0 %v140
    %197 = vmatprep.subr.mxu0 %v145
    %198 = vmatpush1.msra.mxu0 %v144
    %199 = vmatprep.subr.mxu0 %v149
    %200 = vmatpush1.msra.mxu0 %v148
    %201 = vmatprep.subr.mxu0 0.0
    %202 = vmatpush1.msra.mxu0 0.0
    %203 = vmatprep.subr.mxu0 0.0
    %204 = vmatpush1.msra.mxu0 0.0
    %205 = vmatprep.subr.mxu0 0.0
    %206 = vmatpush1.msra.mxu0 0.0
    %207 = vmatprep.subr.mxu0 0.0
    %208 = vmatpush1.msra.mxu0 0.0
    %209 = vmatprep.subr.mxu0 0.0
    %210 = vmatpush1.msra.mxu0 0.0
    %211 = vmatprep.subr.mxu0 0.0
    %212 = vmatpush1.msra.mxu0 0.0
    %213 = vmatprep.subr.mxu0 0.0
    %214 = vmatpush1.msra.mxu0 0.0
    %215 = vmatprep.subr.mxu0 0.0
    %216 = vmatpush1.msra.mxu0 0.0
    %217 = vmatprep.subr.mxu0 0.0
    %218 = vmatpush1.msra.mxu0 0.0
    %219 = vmatprep.subr.mxu0 0.0
    %220 = vmatpush1.msra.mxu0 0.0
    %221 = vmatprep.subr.mxu0 0.0
    %222 = vmatpush1.msra.mxu0 0.0
    %223 = vmatprep.subr.mxu0 0.0
    %224 = vmatpush1.msra.mxu0 0.0
    %225 = vmatprep.subr.mxu0 0.0
    %226 = vmatpush1.msra.mxu0 0.0
    %227 = vmatprep.subr.mxu0 0.0
    %228 = vmatpush1.msra.mxu0 0.0
    %229 = vmatprep.subr.mxu0 0.0
    %230 = vmatpush1.msra.mxu0 0.0
    %231 = vmatprep.subr.mxu0 0.0
    %232 = vmatpush1.msra.mxu0 0.0
    %233 = vmatprep.mubr.f32.mxu0 0.0
    %234 = vmatmul.mubr.f32.gmra.mrb[0].mxu0 %v87
    %v235 = vpop.f32.mrb[0].mxu0
    %v236 = vadd.f32 %v157, %v235
    %v237 = vpop.f32.mrb[0].mxu0
    %238 = vdwg.mxu0
    %239 = vmatprep.subr.mxu0 %v91
    %240 = vmatpush1.msra.mxu0 %v90
    %241 = vmatprep.subr.mxu0 %v95
    %242 = vmatpush1.msra.mxu0 %v94
    %243 = vmatprep.subr.mxu0 %v99
    %244 = vmatpush1.msra.mxu0 %v98
    %245 = vmatprep.subr.mxu0 %v103
    %246 = vmatpush1.msra.mxu0 %v102
    %247 = vmatprep.subr.mxu0 %v107
    %248 = vmatpush1.msra.mxu0 %v106
    %249 = vmatprep.subr.mxu0 %v111
    %250 = vmatpush1.msra.mxu0 %v110
    %251 = vmatprep.subr.mxu0 %v115
    %252 = vmatpush1.msra.mxu0 %v114
    %253 = vmatprep.subr.mxu0 %v119
    %254 = vmatpush1.msra.mxu0 %v118
    %255 = vmatprep.subr.mxu0 %v123
    %256 = vmatpush1.msra.mxu0 %v122
    %257 = vmatprep.subr.mxu0 %v127
    %258 = vmatpush1.msra.mxu0 %v126
    %259 = vmatprep.subr.mxu0 %v131
    %260 = vmatpush1.msra.mxu0 %v130
    %261 = vmatprep.subr.mxu0 %v135
    %262 = vmatpush1.msra.mxu0 %v134
    %263 = vmatprep.subr.mxu0 %v139
    %264 = vmatpush1.msra.mxu0 %v138
    %265 = vmatprep.subr.mxu0 %v143
    %266 = vmatpush1.msra.mxu0 %v142
    %267 = vmatprep.subr.mxu0 %v147
    %268 = vmatpush1.msra.mxu0 %v146
    %269 = vmatprep.subr.mxu0 %v151
    %270 = vmatpush1.msra.mxu0 %v150
    %271 = vmatprep.subr.mxu0 0.0
    %272 = vmatpush1.msra.mxu0 0.0
    %273 = vmatprep.subr.mxu0 0.0
    %274 = vmatpush1.msra.mxu0 0.0
    %275 = vmatprep.subr.mxu0 0.0
    %276 = vmatpush1.msra.mxu0 0.0
    %277 = vmatprep.subr.mxu0 0.0
    %278 = vmatpush1.msra.mxu0 0.0
    %279 = vmatprep.subr.mxu0 0.0
    %280 = vmatpush1.msra.mxu0 0.0
    %281 = vmatprep.subr.mxu0 0.0
    %282 = vmatpush1.msra.mxu0 0.0
    %283 = vmatprep.subr.mxu0 0.0
    %284 = vmatpush1.msra.mxu0 0.0
    %285 = vmatprep.subr.mxu0 0.0
    %286 = vmatpush1.msra.mxu0 0.0
    %287 = vmatprep.subr.mxu0 0.0
    %288 = vmatpush1.msra.mxu0 0.0
    %289 = vmatprep.subr.mxu0 0.0
    %290 = vmatpush1.msra.mxu0 0.0
    %291 = vmatprep.subr.mxu0 0.0
    %292 = vmatpush1.msra.mxu0 0.0
    %293 = vmatprep.subr.mxu0 0.0
    %294 = vmatpush1.msra.mxu0 0.0
    %295 = vmatprep.subr.mxu0 0.0
    %296 = vmatpush1.msra.mxu0 0.0
    %297 = vmatprep.subr.mxu0 0.0
    %298 = vmatpush1.msra.mxu0 0.0
    %299 = vmatprep.subr.mxu0 0.0
    %300 = vmatpush1.msra.mxu0 0.0
    %301 = vmatprep.subr.mxu0 0.0
    %302 = vmatpush1.msra.mxu0 0.0
    %303 = vmatprep.mubr.f32.mxu0 0.0
    %304 = vmatmul.mubr.f32.gmra.mrb[0].mxu0 %v87
    %v305 = vpop.f32.mrb[0].mxu0
    %v306 = vadd.f32 %v161, %v305
    %v307 = vpop.f32.mrb[0].mxu0
    %v308 = vadd.f32 %v165, %v307
    %309 = vdwg.mxu0
    %v310 = vxor.u32 %v236, 2147483648
    %v311 = vmul.f32 %v310, 1.442695
    %v312 = vpow.pop %v311
    %v313 = vadd.f32 %v312, 1.0
    %v314 = vrcp.pop %v313
    %v315 = vmul.f32 1.0, %v314
    %v316 = vtanh.pop %v306
    %v317 = vxor.u32 %v308, 2147483648
    %v318 = vmul.f32 %v317, 1.442695
    %v319 = vpow.pop %v318
    %v320 = vadd.f32 %v319, 1.0
    %v321 = vrcp.pop %v320
    %v322 = vmul.f32 1.0, %v321
    %v323 = vmul.f32 %v315, %v316
    %v324 = vtanh.pop %v323
    %v325 = vmul.f32 %v322, %v324
    %v326 = vld [vmem:[#allocation4] sm:$0xff]
    %v327 = vld [vmem:[#allocation4 + $0x8] sm:$0xff]
    %v328 = vld [vmem:[#allocation4 + $0x10] sm:$0xff]
    %v329 = vld [vmem:[#allocation4 + $0x18] sm:$0xff]
    %v330 = vld [vmem:[#allocation4 + $0x20] sm:$0xff]
    %v331 = vld [vmem:[#allocation4 + $0x28] sm:$0xff]
    %v332 = vld [vmem:[#allocation4 + $0x30] sm:$0xff]
    %v333 = vld [vmem:[#allocation4 + $0x38] sm:$0xff]
    %v334 = vld [vmem:[#allocation4 + $0x40] sm:$0xff]
    %v335 = vld [vmem:[#allocation4 + $0x48] sm:$0xff]
    %v336 = vld [vmem:[#allocation4 + $0x50] sm:$0xff]
    %v337 = vld [vmem:[#allocation4 + $0x58] sm:$0xff]
    %v338 = vld [vmem:[#allocation4 + $0x60] sm:$0xff]
    %v339 = vld [vmem:[#allocation4 + $0x68] sm:$0xff]
    %v340 = vld [vmem:[#allocation4 + $0x70] sm:$0xff]
    %v341 = vld [vmem:[#allocation4 + $0x78] sm:$0xff]
    %v342 = vld [vmem:[%s4] sm:$0x1]
    %v344 = vlaneseq
    %v345 = vshrl.u32 %v344, 7
    %v346 = vsub.s32 0, %v345
    %v347 = vrot.slane %v342, %v346
    %349 = vmatprep.subr.mxu0 0.0
    %350 = vmatpush1.msra.mxu0 %v326
    %351 = vmatprep.subr.mxu0 0.0
    %352 = vmatpush1.msra.mxu0 %v327
    %353 = vmatprep.subr.mxu0 0.0
    %354 = vmatpush1.msra.mxu0 %v328
    %355 = vmatprep.subr.mxu0 0.0
    %356 = vmatpush1.msra.mxu0 %v329
    %357 = vmatprep.subr.mxu0 0.0
    %358 = vmatpush1.msra.mxu0 %v330
    %359 = vmatprep.subr.mxu0 0.0
    %360 = vmatpush1.msra.mxu0 %v331
    %361 = vmatprep.subr.mxu0 0.0
    %362 = vmatpush1.msra.mxu0 %v332
    %363 = vmatprep.subr.mxu0 0.0
    %364 = vmatpush1.msra.mxu0 %v333
    %365 = vmatprep.subr.mxu0 0.0
    %366 = vmatpush1.msra.mxu0 %v334
    %367 = vmatprep.subr.mxu0 0.0
    %368 = vmatpush1.msra.mxu0 %v335
    %369 = vmatprep.subr.mxu0 0.0
    %370 = vmatpush1.msra.mxu0 %v336
    %371 = vmatprep.subr.mxu0 0.0
    %372 = vmatpush1.msra.mxu0 %v337
    %373 = vmatprep.subr.mxu0 0.0
    %374 = vmatpush1.msra.mxu0 %v338
    %375 = vmatprep.subr.mxu0 0.0
    %376 = vmatpush1.msra.mxu0 %v339
    %377 = vmatprep.subr.mxu0 0.0
    %378 = vmatpush1.msra.mxu0 %v340
    %379 = vmatprep.subr.mxu0 0.0
    %380 = vmatpush1.msra.mxu0 %v341
    %381 = vmatprep.subr.mxu0 0.0
    %382 = vmatpush1.msra.mxu0 0.0
    %383 = vmatprep.subr.mxu0 0.0
    %384 = vmatpush1.msra.mxu0 0.0
    %385 = vmatprep.subr.mxu0 0.0
    %386 = vmatpush1.msra.mxu0 0.0
    %387 = vmatprep.subr.mxu0 0.0
    %388 = vmatpush1.msra.mxu0 0.0
    %389 = vmatprep.subr.mxu0 0.0
    %390 = vmatpush1.msra.mxu0 0.0
    %391 = vmatprep.subr.mxu0 0.0
    %392 = vmatpush1.msra.mxu0 0.0
    %393 = vmatprep.subr.mxu0 0.0
    %394 = vmatpush1.msra.mxu0 0.0
    %395 = vmatprep.subr.mxu0 0.0
    %396 = vmatpush1.msra.mxu0 0.0
    %397 = vmatprep.subr.mxu0 0.0
    %398 = vmatpush1.msra.mxu0 0.0
    %399 = vmatprep.subr.mxu0 0.0
    %400 = vmatpush1.msra.mxu0 0.0
    %401 = vmatprep.subr.mxu0 0.0
    %402 = vmatpush1.msra.mxu0 0.0
    %403 = vmatprep.subr.mxu0 0.0
    %404 = vmatpush1.msra.mxu0 0.0
    %405 = vmatprep.subr.mxu0 0.0
    %406 = vmatpush1.msra.mxu0 0.0
    %407 = vmatprep.subr.mxu0 0.0
    %408 = vmatpush1.msra.mxu0 0.0
    %409 = vmatprep.subr.mxu0 0.0
    %410 = vmatpush1.msra.mxu0 0.0
    %411 = vmatprep.subr.mxu0 0.0
    %412 = vmatpush1.msra.mxu0 0.0
    %413 = vmatprep.mubr.f32.mxu0 0.0
    %414 = vmatmul.mubr.f32.gmra.mrb[0].mxu0 %v325
    %v415 = vpop.f32.mrb[0].mxu0
    %v416 = vadd.f32 %v347, %v415
    %v417 = vpop.f32.mrb[0].mxu0
    %418 = vdwg.mxu0
    %v419 = vld [vmem:[#allocation6] sm:$0xff]
    %v420 = vld [vmem:[#allocation6 + $0x8] sm:$0xff]
    %v421 = vld [vmem:[#allocation6 + $0x10] sm:$0xff]
    %v422 = vld [vmem:[#allocation6 + $0x18] sm:$0xff]
    %v423 = vld [vmem:[#allocation6 + $0x20] sm:$0xff]
    %v424 = vld [vmem:[#allocation6 + $0x28] sm:$0xff]
    %v425 = vld [vmem:[#allocation6 + $0x30] sm:$0xff]
    %v426 = vld [vmem:[#allocation6 + $0x38] sm:$0xff]
    %v427 = vld [vmem:[#allocation6 + $0x40] sm:$0xff]
    %v428 = vld [vmem:[#allocation6 + $0x48] sm:$0xff]
    %v429 = vld [vmem:[#allocation6 + $0x50] sm:$0xff]
    %v430 = vld [vmem:[#allocation6 + $0x58] sm:$0xff]
    %v431 = vld [vmem:[#allocation6 + $0x60] sm:$0xff]
    %v432 = vld [vmem:[#allocation6 + $0x68] sm:$0xff]
    %v433 = vld [vmem:[#allocation6 + $0x70] sm:$0xff]
    %v434 = vld [vmem:[#allocation6 + $0x78] sm:$0xff]
    %v435 = vld [vmem:[#allocation6 + $0x80] sm:$0xff]
    %v436 = vld [vmem:[#allocation6 + $0x88] sm:$0xff]
    %v437 = vld [vmem:[#allocation6 + $0x90] sm:$0xff]
    %v438 = vld [vmem:[#allocation6 + $0x98] sm:$0xff]
    %v439 = vld [vmem:[#allocation6 + $0xa0] sm:$0xff]
    %v440 = vld [vmem:[#allocation6 + $0xa8] sm:$0xff]
    %v441 = vld [vmem:[#allocation6 + $0xb0] sm:$0xff]
    %v442 = vld [vmem:[#allocation6 + $0xb8] sm:$0xff]
    %v443 = vld [vmem:[#allocation6 + $0xc0] sm:$0xff]
    %v444 = vld [vmem:[#allocation6 + $0xc8] sm:$0xff]
    %v445 = vld [vmem:[#allocation6 + $0xd0] sm:$0xff]
    %v446 = vld [vmem:[#allocation6 + $0xd8] sm:$0xff]
    %v447 = vld [vmem:[#allocation6 + $0xe0] sm:$0xff]
    %v448 = vld [vmem:[#allocation6 + $0xe8] sm:$0xff]
    %v449 = vld [vmem:[#allocation6 + $0xf0] sm:$0xff]
    %v450 = vld [vmem:[#allocation6 + $0xf8] sm:$0xff]
    %v451 = vld [vmem:[#allocation6 + $0x100] sm:$0xff]
    %v452 = vld [vmem:[#allocation6 + $0x108] sm:$0xff]
    %v453 = vld [vmem:[#allocation6 + $0x110] sm:$0xff]
    %v454 = vld [vmem:[#allocation6 + $0x118] sm:$0xff]
    %v455 = vld [vmem:[#allocation6 + $0x120] sm:$0xff]
    %v456 = vld [vmem:[#allocation6 + $0x128] sm:$0xff]
    %v457 = vld [vmem:[#allocation6 + $0x130] sm:$0xff]
    %v458 = vld [vmem:[#allocation6 + $0x138] sm:$0xff]
    %v459 = vld [vmem:[#allocation6 + $0x140] sm:$0xff]
    %v460 = vld [vmem:[#allocation6 + $0x148] sm:$0xff]
    %v461 = vld [vmem:[#allocation6 + $0x150] sm:$0xff]
    %v462 = vld [vmem:[#allocation6 + $0x158] sm:$0xff]
    %v463 = vld [vmem:[#allocation6 + $0x160] sm:$0xff]
    %v464 = vld [vmem:[#allocation6 + $0x168] sm:$0xff]
    %v465 = vld [vmem:[#allocation6 + $0x170] sm:$0xff]
    %v466 = vld [vmem:[#allocation6 + $0x178] sm:$0xff]
    %v467 = vld [vmem:[#allocation6 + $0x180] sm:$0xff]
    %v468 = vld [vmem:[#allocation6 + $0x188] sm:$0xff]
    %v469 = vld [vmem:[#allocation6 + $0x190] sm:$0xff]
    %v470 = vld [vmem:[#allocation6 + $0x198] sm:$0xff]
    %v471 = vld [vmem:[#allocation6 + $0x1a0] sm:$0xff]
    %v472 = vld [vmem:[#allocation6 + $0x1a8] sm:$0xff]
    %v473 = vld [vmem:[#allocation6 + $0x1b0] sm:$0xff]
    %v474 = vld [vmem:[#allocation6 + $0x1b8] sm:$0xff]
    %v475 = vld [vmem:[#allocation6 + $0x1c0] sm:$0xff]
    %v476 = vld [vmem:[#allocation6 + $0x1c8] sm:$0xff]
    %v477 = vld [vmem:[#allocation6 + $0x1d0] sm:$0xff]
    %v478 = vld [vmem:[#allocation6 + $0x1d8] sm:$0xff]
    %v479 = vld [vmem:[#allocation6 + $0x1e0] sm:$0xff]
    %v480 = vld [vmem:[#allocation6 + $0x1e8] sm:$0xff]
    %v481 = vld [vmem:[#allocation6 + $0x1f0] sm:$0xff]
    %v482 = vld [vmem:[#allocation6 + $0x1f8] sm:$0xff]
    %v483 = vld [vmem:[%s6] sm:$0xf]
    %v485 = vlaneseq
    %v486 = vshrl.u32 %v485, 7
    %v487 = vsub.s32 0, %v486
    %v488 = vrot.slane %v483, %v487
    %v489 = vlaneseq
    %v490 = vshrl.u32 %v489, 7
    %v491 = vsub.s32 2, %v490
    %v492 = vrot.slane %v483, %v491
    %v493 = vlaneseq
    %v494 = vshrl.u32 %v493, 7
    %v495 = vsub.s32 3, %v494
    %v496 = vrot.slane %v483, %v495
    %500 = vmatprep.subr.mxu0 %v420
    %501 = vmatpush1.msra.mxu0 %v419
    %502 = vmatprep.subr.mxu0 %v424
    %503 = vmatpush1.msra.mxu0 %v423
    %504 = vmatprep.subr.mxu0 %v428
    %505 = vmatpush1.msra.mxu0 %v427
    %506 = vmatprep.subr.mxu0 %v432
    %507 = vmatpush1.msra.mxu0 %v431
    %508 = vmatprep.subr.mxu0 %v436
    %509 = vmatpush1.msra.mxu0 %v435
    %510 = vmatprep.subr.mxu0 %v440
    %511 = vmatpush1.msra.mxu0 %v439
    %512 = vmatprep.subr.mxu0 %v444
    %513 = vmatpush1.msra.mxu0 %v443
    %514 = vmatprep.subr.mxu0 %v448
    %515 = vmatpush1.msra.mxu0 %v447
    %516 = vmatprep.subr.mxu0 %v452
    %517 = vmatpush1.msra.mxu0 %v451
    %518 = vmatprep.subr.mxu0 %v456
    %519 = vmatpush1.msra.mxu0 %v455
    %520 = vmatprep.subr.mxu0 %v460
    %521 = vmatpush1.msra.mxu0 %v459
    %522 = vmatprep.subr.mxu0 %v464
    %523 = vmatpush1.msra.mxu0 %v463
    %524 = vmatprep.subr.mxu0 %v468
    %525 = vmatpush1.msra.mxu0 %v467
    %526 = vmatprep.subr.mxu0 %v472
    %527 = vmatpush1.msra.mxu0 %v471
    %528 = vmatprep.subr.mxu0 %v476
    %529 = vmatpush1.msra.mxu0 %v475
    %530 = vmatprep.subr.mxu0 %v480
    %531 = vmatpush1.msra.mxu0 %v479
    %532 = vmatprep.subr.mxu0 0.0
    %533 = vmatpush1.msra.mxu0 0.0
    %534 = vmatprep.subr.mxu0 0.0
    %535 = vmatpush1.msra.mxu0 0.0
    %536 = vmatprep.subr.mxu0 0.0
    %537 = vmatpush1.msra.mxu0 0.0
    %538 = vmatprep.subr.mxu0 0.0
    %539 = vmatpush1.msra.mxu0 0.0
    %540 = vmatprep.subr.mxu0 0.0
    %541 = vmatpush1.msra.mxu0 0.0
    %542 = vmatprep.subr.mxu0 0.0
    %543 = vmatpush1.msra.mxu0 0.0
    %544 = vmatprep.subr.mxu0 0.0
    %545 = vmatpush1.msra.mxu0 0.0
    %546 = vmatprep.subr.mxu0 0.0
    %547 = vmatpush1.msra.mxu0 0.0
    %548 = vmatprep.subr.mxu0 0.0
    %549 = vmatpush1.msra.mxu0 0.0
    %550 = vmatprep.subr.mxu0 0.0
    %551 = vmatpush1.msra.mxu0 0.0
    %552 = vmatprep.subr.mxu0 0.0
    %553 = vmatpush1.msra.mxu0 0.0
    %554 = vmatprep.subr.mxu0 0.0
    %555 = vmatpush1.msra.mxu0 0.0
    %556 = vmatprep.subr.mxu0 0.0
    %557 = vmatpush1.msra.mxu0 0.0
    %558 = vmatprep.subr.mxu0 0.0
    %559 = vmatpush1.msra.mxu0 0.0
    %560 = vmatprep.subr.mxu0 0.0
    %561 = vmatpush1.msra.mxu0 0.0
    %562 = vmatprep.subr.mxu0 0.0
    %563 = vmatpush1.msra.mxu0 0.0
    %564 = vmatprep.mubr.f32.mxu0 0.0
    %565 = vmatmul.mubr.f32.gmra.mrb[0].mxu0 %v416
    %v566 = vpop.f32.mrb[0].mxu0
    %v567 = vadd.f32 %v488, %v566
    %v568 = vpop.f32.mrb[0].mxu0
    %569 = vdwg.mxu0
    %570 = vmatprep.subr.mxu0 %v422
    %571 = vmatpush1.msra.mxu0 %v421
    %572 = vmatprep.subr.mxu0 %v426
    %573 = vmatpush1.msra.mxu0 %v425
    %574 = vmatprep.subr.mxu0 %v430
    %575 = vmatpush1.msra.mxu0 %v429
    %576 = vmatprep.subr.mxu0 %v434
    %577 = vmatpush1.msra.mxu0 %v433
    %578 = vmatprep.subr.mxu0 %v438
    %579 = vmatpush1.msra.mxu0 %v437
    %580 = vmatprep.subr.mxu0 %v442
    %581 = vmatpush1.msra.mxu0 %v441
    %582 = vmatprep.subr.mxu0 %v446
    %583 = vmatpush1.msra.mxu0 %v445
    %584 = vmatprep.subr.mxu0 %v450
    %585 = vmatpush1.msra.mxu0 %v449
    %586 = vmatprep.subr.mxu0 %v454
    %587 = vmatpush1.msra.mxu0 %v453
    %588 = vmatprep.subr.mxu0 %v458
    %589 = vmatpush1.msra.mxu0 %v457
    %590 = vmatprep.subr.mxu0 %v462
    %591 = vmatpush1.msra.mxu0 %v461
    %592 = vmatprep.subr.mxu0 %v466
    %593 = vmatpush1.msra.mxu0 %v465
    %594 = vmatprep.subr.mxu0 %v470
    %595 = vmatpush1.msra.mxu0 %v469
    %596 = vmatprep.subr.mxu0 %v474
    %597 = vmatpush1.msra.mxu0 %v473
    %598 = vmatprep.subr.mxu0 %v478
    %599 = vmatpush1.msra.mxu0 %v477
    %600 = vmatprep.subr.mxu0 %v482
    %601 = vmatpush1.msra.mxu0 %v481
    %602 = vmatprep.subr.mxu0 0.0
    %603 = vmatpush1.msra.mxu0 0.0
    %604 = vmatprep.subr.mxu0 0.0
    %605 = vmatpush1.msra.mxu0 0.0
    %606 = vmatprep.subr.mxu0 0.0
    %607 = vmatpush1.msra.mxu0 0.0
    %608 = vmatprep.subr.mxu0 0.0
    %609 = vmatpush1.msra.mxu0 0.0
    %610 = vmatprep.subr.mxu0 0.0
    %611 = vmatpush1.msra.mxu0 0.0
    %612 = vmatprep.subr.mxu0 0.0
    %613 = vmatpush1.msra.mxu0 0.0
    %614 = vmatprep.subr.mxu0 0.0
    %615 = vmatpush1.msra.mxu0 0.0
    %616 = vmatprep.subr.mxu0 0.0
    %617 = vmatpush1.msra.mxu0 0.0
    %618 = vmatprep.subr.mxu0 0.0
    %619 = vmatpush1.msra.mxu0 0.0
    %620 = vmatprep.subr.mxu0 0.0
    %621 = vmatpush1.msra.mxu0 0.0
    %622 = vmatprep.subr.mxu0 0.0
    %623 = vmatpush1.msra.mxu0 0.0
    %624 = vmatprep.subr.mxu0 0.0
    %625 = vmatpush1.msra.mxu0 0.0
    %626 = vmatprep.subr.mxu0 0.0
    %627 = vmatpush1.msra.mxu0 0.0
    %628 = vmatprep.subr.mxu0 0.0
    %629 = vmatpush1.msra.mxu0 0.0
    %630 = vmatprep.subr.mxu0 0.0
    %631 = vmatpush1.msra.mxu0 0.0
    %632 = vmatprep.subr.mxu0 0.0
    %633 = vmatpush1.msra.mxu0 0.0
    %634 = vmatprep.mubr.f32.mxu0 0.0
    %635 = vmatmul.mubr.f32.gmra.mrb[0].mxu0 %v416
    %v636 = vpop.f32.mrb[0].mxu0
    %v637 = vadd.f32 %v492, %v636
    %v638 = vpop.f32.mrb[0].mxu0
    %v639 = vadd.f32 %v496, %v638
    %640 = vdwg.mxu0
    %v641 = vxor.u32 %v567, 2147483648
    %v642 = vmul.f32 %v641, 1.442695
    %v643 = vpow.pop %v642
    %v644 = vadd.f32 %v643, 1.0
    %v645 = vrcp.pop %v644
    %v646 = vmul.f32 1.0, %v645
    %v647 = vtanh.pop %v637
    %v648 = vxor.u32 %v639, 2147483648
    %v649 = vmul.f32 %v648, 1.442695
    %v650 = vpow.pop %v649
    %v651 = vadd.f32 %v650, 1.0
    %v652 = vrcp.pop %v651
    %v653 = vmul.f32 1.0, %v652
    %v654 = vmul.f32 %v646, %v647
    %v655 = vtanh.pop %v654
    %v656 = vmul.f32 %v653, %v655
    %v657 = vld [vmem:[#allocation7] sm:$0xff]
    %v658 = vld [vmem:[#allocation7 + $0x8] sm:$0xff]
    %v659 = vld [vmem:[#allocation7 + $0x10] sm:$0xff]
    %v660 = vld [vmem:[#allocation7 + $0x18] sm:$0xff]
    %v661 = vld [vmem:[#allocation7 + $0x20] sm:$0xff]
    %v662 = vld [vmem:[#allocation7 + $0x28] sm:$0xff]
    %v663 = vld [vmem:[#allocation7 + $0x30] sm:$0xff]
    %v664 = vld [vmem:[#allocation7 + $0x38] sm:$0xff]
    %v665 = vld [vmem:[#allocation7 + $0x40] sm:$0xff]
    %v666 = vld [vmem:[#allocation7 + $0x48] sm:$0xff]
    %v667 = vld [vmem:[#allocation7 + $0x50] sm:$0xff]
    %v668 = vld [vmem:[#allocation7 + $0x58] sm:$0xff]
    %v669 = vld [vmem:[#allocation7 + $0x60] sm:$0xff]
    %v670 = vld [vmem:[#allocation7 + $0x68] sm:$0xff]
    %v671 = vld [vmem:[#allocation7 + $0x70] sm:$0xff]
    %v672 = vld [vmem:[#allocation7 + $0x78] sm:$0xff]
    %v673 = vld [vmem:[%s8] sm:$0x1]
    %v675 = vlaneseq
    %v676 = vshrl.u32 %v675, 7
    %v677 = vsub.s32 0, %v676
    %v678 = vrot.slane %v673, %v677
    %680 = vmatprep.subr.mxu0 0.0
    %681 = vmatpush1.msra.mxu0 %v657
    %682 = vmatprep.subr.mxu0 0.0
    %683 = vmatpush1.msra.mxu0 %v658
    %684 = vmatprep.subr.mxu0 0.0
    %685 = vmatpush1.msra.mxu0 %v659
    %686 = vmatprep.subr.mxu0 0.0
    %687 = vmatpush1.msra.mxu0 %v660
    %688 = vmatprep.subr.mxu0 0.0
    %689 = vmatpush1.msra.mxu0 %v661
    %690 = vmatprep.subr.mxu0 0.0
    %691 = vmatpush1.msra.mxu0 %v662
    %692 = vmatprep.subr.mxu0 0.0
    %693 = vmatpush1.msra.mxu0 %v663
    %694 = vmatprep.subr.mxu0 0.0
    %695 = vmatpush1.msra.mxu0 %v664
    %696 = vmatprep.subr.mxu0 0.0
    %697 = vmatpush1.msra.mxu0 %v665
    %698 = vmatprep.subr.mxu0 0.0
    %699 = vmatpush1.msra.mxu0 %v666
    %700 = vmatprep.subr.mxu0 0.0
    %701 = vmatpush1.msra.mxu0 %v667
    %702 = vmatprep.subr.mxu0 0.0
    %703 = vmatpush1.msra.mxu0 %v668
    %704 = vmatprep.subr.mxu0 0.0
    %705 = vmatpush1.msra.mxu0 %v669
    %706 = vmatprep.subr.mxu0 0.0
    %707 = vmatpush1.msra.mxu0 %v670
    %708 = vmatprep.subr.mxu0 0.0
    %709 = vmatpush1.msra.mxu0 %v671
    %710 = vmatprep.subr.mxu0 0.0
    %711 = vmatpush1.msra.mxu0 %v672
    %712 = vmatprep.subr.mxu0 0.0
    %713 = vmatpush1.msra.mxu0 0.0
    %714 = vmatprep.subr.mxu0 0.0
    %715 = vmatpush1.msra.mxu0 0.0
    %716 = vmatprep.subr.mxu0 0.0
    %717 = vmatpush1.msra.mxu0 0.0
    %718 = vmatprep.subr.mxu0 0.0
    %719 = vmatpush1.msra.mxu0 0.0
    %720 = vmatprep.subr.mxu0 0.0
    %721 = vmatpush1.msra.mxu0 0.0
    %722 = vmatprep.subr.mxu0 0.0
    %723 = vmatpush1.msra.mxu0 0.0
    %724 = vmatprep.subr.mxu0 0.0
    %725 = vmatpush1.msra.mxu0 0.0
    %726 = vmatprep.subr.mxu0 0.0
    %727 = vmatpush1.msra.mxu0 0.0
    %728 = vmatprep.subr.mxu0 0.0
    %729 = vmatpush1.msra.mxu0 0.0
    %730 = vmatprep.subr.mxu0 0.0
    %731 = vmatpush1.msra.mxu0 0.0
    %732 = vmatprep.subr.mxu0 0.0
    %733 = vmatpush1.msra.mxu0 0.0
    %734 = vmatprep.subr.mxu0 0.0
    %735 = vmatpush1.msra.mxu0 0.0
    %736 = vmatprep.subr.mxu0 0.0
    %737 = vmatpush1.msra.mxu0 0.0
    %738 = vmatprep.subr.mxu0 0.0
    %739 = vmatpush1.msra.mxu0 0.0
    %740 = vmatprep.subr.mxu0 0.0
    %741 = vmatpush1.msra.mxu0 0.0
    %742 = vmatprep.subr.mxu0 0.0
    %743 = vmatpush1.msra.mxu0 0.0
    %744 = vmatprep.mubr.f32.mxu0 0.0
    %745 = vmatmul.mubr.f32.gmra.mrb[0].mxu0 %v656
    %v746 = vpop.f32.mrb[0].mxu0
    %v747 = vadd.f32 %v678, %v746
    %v748 = vpop.f32.mrb[0].mxu0
    %749 = vdwg.mxu0
    %750 = vst [vmem:[%s9] sm:$0xff] %v747
    // Predicated region
    $region54: #{autoencoder_forward.1} parent=1 // pred_check
      _
    $region55: #{autoencoder_forward.1} parent=1 // pred_check_branch
      %752 = sbr.rel (0) target = $region57
    $region56: #{autoencoder_forward.1} parent=1 // pred_region
      _
    $region57: #{autoencoder_forward.1} parent=1 // pred_fallthru
      _
    // Predicated region
    $region58: #{autoencoder_forward.1} parent=1 // pred_check
      _
    $region59: #{autoencoder_forward.1} parent=1 // pred_check_branch
      %754 = sbr.rel (0) target = $region61
    $region60: #{autoencoder_forward.1} parent=1 // pred_region
      _
    $region61: #{autoencoder_forward.1} parent=1 // pred_fallthru
      _
    %755 = vsyncpa [#allocation3], 1
    %756 = vsyncpa [#allocation5], 1
    %757 = vsyncpa [#allocation8], 1

</llo_original>
